<compile_context>
chip_gen: v7x
topology: tpu7x:2x2x1
jax: 0.10.0
libtpu: 0.0.40
codegen_flags: <defaults>
</compile_context>

<pallas_src>
import functools

import jax
import jax.numpy as jnp
from jax import lax
from jax.experimental import pallas as pl
from jax.experimental.pallas import tpu as pltpu


def _pair(v):
    return (v, v) if isinstance(v, int) else tuple(v)


def _quadruple(v):
    return (v, v, v, v) if isinstance(v, int) else tuple(v)


def _choose_channel_block(nc, h, w, hp, wp, oh, ow, dtype, sw):
    """Channel (leading-dim) block size cb and the number of grid steps.

    Per-step VMEM ~= cb * per_ch bytes (double-buffered in/out blocks in the
    input dtype + the f32 scratches).  Target ~1-2 MiB per step (generation
    aware): big enough to sit near the HBM roofline, far below every
    generation's default scoped-VMEM limit.  cb lives on the leading dim so
    there is no 128-lane floor and it can shrink to 1 for big images.
    """
    itemsize = jnp.dtype(dtype).itemsize
    per_ch = (2 * h * w * itemsize          # double-buffered input block
              + 2 * oh * ow * itemsize      # double-buffered output block
              + 4 * hp * wp)                # f32 padded-squares scratch
    if sw > 1:
        per_ch += 4 * wp * oh               # f32 transposed row-sum scratch
    try:
        vmem = pltpu.get_tpu_info().vmem_capacity_bytes
        target = (2 << 20) if vmem >= (96 << 20) else (1 << 20)
    except Exception:
        target = 1 << 20
    cb = max(1, min(nc, target // max(per_ch, 1)))
    # Prefer >= 8 grid steps (DMA/compute overlap per core; 2 TCs on v7x) as
    # long as blocks stay >= ~256 KiB so the ~0.35us/step overhead is small.
    while cb > 1 and nc // cb < 8 and (cb // 2) * per_ch >= (256 << 10):
        cb //= 2
    # Make cb divide nc exactly so every block is full (no boundary blocks).
    while nc % cb:
        cb -= 1
    return cb, nc // cb


def _sqrt_pool_kernel(x_ref, o_ref, p_ref, *scratch, kh, kw, sh, sw,
                      oh, ow, h, w, pads):
    """One channel-block step: o = sqrt(sum over the kh x kw window of x^2).

    x_ref : (cb, h,  w )  native-layout input block (input dtype)
    o_ref : (cb, oh, ow)  native-layout output block
    p_ref : (cb, hp, wp)  f32 VMEM scratch holding the zero-padded squares
    scratch[0] (only when sw > 1): (cb, wp, oh) f32 scratch for the
        transposed row sums (read back with sublane-strided loads).
    """
    pleft, pright, ptop, pbot = pads
    cb, hp, wp = p_ref.shape

    # Square in f32 (cast AFTER the DMA so bf16 inputs stay bf16 over HBM).
    x = x_ref[...].astype(jnp.float32)
    x2 = x * x

    if ptop or pbot or pleft or pright:
        # Zero only the pad border (every step -> safe under any grid
        # sharding); the interior is fully overwritten below.
        if ptop:
            p_ref[:, :ptop, :] = jnp.zeros((cb, ptop, wp), jnp.float32)
        if pbot:
            p_ref[:, ptop + h:, :] = jnp.zeros((cb, pbot, wp), jnp.float32)
        if pleft:
            p_ref[:, :, :pleft] = jnp.zeros((cb, hp, pleft), jnp.float32)
        if pright:
            p_ref[:, :, pleft + w:] = jnp.zeros((cb, hp, pright), jnp.float32)
        p_ref[:, ptop:ptop + h, pleft:pleft + w] = x2
    else:
        p_ref[...] = x2

    # ---- H-direction taps: reads along the sublane axis of the scratch ----
    def row_tap(ki):
        if sh == 1:
            return p_ref[:, ki:ki + oh, :]
        return p_ref[:, pl.ds(ki, oh, stride=sh), :]

    rowsum = row_tap(0)
    for ki in range(1, kh):
        rowsum = rowsum + row_tap(ki)                     # (cb, oh, wp) f32

    # ---- W-direction taps ----
    if sw == 1:
        # Static lane-offset slices; no strided access on the lane dim.
        acc = lax.slice(rowsum, (0, 0, 0), (cb, oh, ow))
        for kj in range(1, kw):
            acc = acc + lax.slice(rowsum, (0, 0, kj), (cb, oh, kj + ow))
        o_ref[...] = jnp.sqrt(acc).astype(o_ref.dtype)
    else:
        # Keep strided access off the lane dim: swap the minor dims with the
        # (otherwise idle) XLU, then take sublane-strided taps from a scratch.
        q_ref = scratch[0]
        q_ref[...] = jnp.swapaxes(rowsum, 1, 2)           # (cb, wp, oh)
        acc = q_ref[:, pl.ds(0, ow, stride=sw), :]
        for kj in range(1, kw):
            acc = acc + q_ref[:, pl.ds(kj, ow, stride=sw), :]
        o_ref[...] = jnp.swapaxes(jnp.sqrt(acc), 1, 2).astype(o_ref.dtype)


class SqrtPool2D:
    """L2 ("sqrt") pool matching the PyTorch reference module's forward."""

    def __init__(self, kernel_size=3, stride=1, padding=0, same=False):
        self.k = _pair(kernel_size)
        self.stride = _pair(stride)
        self.padding = _quadruple(padding)
        self.same = same

    def _padding_amounts(self, x):
        if self.same:
            ih, iw = x.shape[2:]
            if ih % self.stride[0] == 0:
                ph = max(self.k[0] - self.stride[0], 0)
            else:
                ph = max(self.k[0] - ih % self.stride[0], 0)
            if iw % self.stride[1] == 0:
                pw = max(self.k[1] - self.stride[1], 0)
            else:
                pw = max(self.k[1] - iw % self.stride[1], 0)
            pleft = pw // 2
            pright = pw - pleft
            ptop = ph // 2
            pbot = ph - ptop
            return (pleft, pright, ptop, pbot)
        return self.padding

    def __call__(self, x):
        n, c, h, w = x.shape
        pleft, pright, ptop, pbot = self._padding_amounts(x)
        kh, kw = self.k
        sh, sw = self.stride
        hp = h + ptop + pbot
        wp = w + pleft + pright
        oh = (hp - kh) // sh + 1
        ow = (wp - kw) // sw + 1
        nc = n * c

        # Native layout all the way: only free reshapes outside the kernel.
        x3 = x.reshape(nc, h, w)

        cb, num_blocks = _choose_channel_block(
            nc, h, w, hp, wp, oh, ow, x.dtype, sw)

        kernel = functools.partial(
            _sqrt_pool_kernel, kh=kh, kw=kw, sh=sh, sw=sw, oh=oh, ow=ow,
            h=h, w=w, pads=(pleft, pright, ptop, pbot))

        scratch_shapes = [pltpu.VMEM((cb, hp, wp), jnp.float32)]
        if sw > 1:
            scratch_shapes.append(pltpu.VMEM((cb, wp, oh), jnp.float32))

        out = pl.pallas_call(
            kernel,
            out_shape=jax.ShapeDtypeStruct((nc, oh, ow), x.dtype),
            grid=(num_blocks,),
            in_specs=[pl.BlockSpec((cb, h, w), lambda i: (i, 0, 0))],
            out_specs=pl.BlockSpec((cb, oh, ow), lambda i: (i, 0, 0)),
            scratch_shapes=scratch_shapes,
            compiler_params=pltpu.CompilerParams(
                dimension_semantics=("parallel",)),
        )(x3)
        return out.reshape(n, c, oh, ow)


def _reference_sqrt_pool(x, k, stride, pads):
    # Pure-JAX reference: sqrt of the windowed sum of squares of the padded x.
    pleft, pright, ptop, pbot = pads
    kh, kw = k
    sh, sw = stride
    xf = jnp.pad(x.astype(jnp.float32),
                 ((0, 0), (0, 0), (ptop, pbot), (pleft, pright)))
    s = lax.reduce_window(xf * xf, 0.0, lax.add,
                          window_dimensions=(1, 1, kh, kw),
                          window_strides=(1, 1, sh, sw),
                          padding="VALID")
    return jnp.sqrt(s).astype(x.dtype)


def _check(mod, x, atol=1e-5, rtol=1e-5):
    y = jax.block_until_ready(mod(x))
    y_ref = _reference_sqrt_pool(x, mod.k, mod.stride, mod._padding_amounts(x))
    assert y.shape == y_ref.shape, (y.shape, y_ref.shape)
    err = jnp.max(jnp.abs(y.astype(jnp.float32) - y_ref.astype(jnp.float32)))
    assert jnp.allclose(y, y_ref, atol=atol, rtol=rtol), float(err)
    return y


if __name__ == "__main__":
    key = jax.random.PRNGKey(0)

    # Base case at the module-spec shapes: N*C = 8, 16x16, k=3, stride=1.
    x = jax.random.normal(key, (2, 4, 16, 16), dtype=jnp.float32)
    y = _check(SqrtPool2D(kernel_size=3, stride=1, padding=0), x)
    assert y.shape == (2, 4, 14, 14), y.shape

    # Explicit zero padding, now handled entirely inside the kernel.
    y = _check(SqrtPool2D(kernel_size=3, stride=1, padding=1), x)
    assert y.shape == (2, 4, 16, 16), y.shape

    # 'same' padding branch (k=2 -> asymmetric right/bottom pad).
    y = _check(SqrtPool2D(kernel_size=2, stride=1, same=True), x)
    assert y.shape == (2, 4, 16, 16), y.shape

    # Many channels -> multiple grid steps (channel-block pipelining).
    x_wide = jax.random.normal(jax.random.PRNGKey(0), (2, 256, 16, 16),
                               dtype=jnp.float32)
    y = _check(SqrtPool2D(kernel_size=3, stride=1, padding=0), x_wide)
    assert y.shape == (2, 256, 14, 14), y.shape

    print("KERNEL_OK")
</pallas_src>

<mosaic_0001>
module attributes {stable_mosaic.version = 11 : i64} {
  func.func @_sqrt_pool_kernel(%arg0: i32, %arg1: memref<8x16x16xf32, #tpu.memory_space<vmem>>, %arg2: memref<8x14x14xf32, #tpu.memory_space<vmem>>, %arg3: memref<8x16x16xf32, #tpu.memory_space<vmem>>) attributes {dimension_semantics = [#tpu.dimension_semantics<parallel>], iteration_bounds = array<i64: 1>, scalar_prefetch = 0 : i64, scratch_operands = 1 : i64, tpu.core_type = #tpu.core_type<tc>, window_params = [{transform_indices = @transform_0, window_bounds = array<i64: 8, 16, 16>}, {transform_indices = @transform_1, window_bounds = array<i64: 8, 14, 14>}]} {
    %c0 = arith.constant 0 : index
    %c0_0 = arith.constant 0 : index
    %c0_1 = arith.constant 0 : index
    %0 = vector.load %arg1[%c0, %c0_0, %c0_1] : memref<8x16x16xf32, #tpu.memory_space<vmem>>, vector<8x16x16xf32>
    %1 = arith.mulf %0, %0 : vector<8x16x16xf32>
    %c0_2 = arith.constant 0 : index
    %c0_3 = arith.constant 0 : index
    %c0_4 = arith.constant 0 : index
    %2 = vector.load %arg3[%c0_2, %c0_3, %c0_4] : memref<8x16x16xf32, #tpu.memory_space<vmem>>, vector<8x16x16xf32>
    tpu.vector_store %arg3[%c0_2, %c0_3, %c0_4], %1 {strides = array<i32>} : memref<8x16x16xf32, #tpu.memory_space<vmem>>, vector<8x16x16xf32>,
    %c0_5 = arith.constant 0 : index
    %c0_6 = arith.constant 0 : index
    %c0_7 = arith.constant 0 : index
    %3 = vector.load %arg3[%c0_5, %c0_6, %c0_7] : memref<8x16x16xf32, #tpu.memory_space<vmem>>, vector<8x14x16xf32>
    %c0_8 = arith.constant 0 : index
    %c1 = arith.constant 1 : index
    %c0_9 = arith.constant 0 : index
    %4 = vector.load %arg3[%c0_8, %c1, %c0_9] : memref<8x16x16xf32, #tpu.memory_space<vmem>>, vector<8x14x16xf32>
    %5 = arith.addf %3, %4 : vector<8x14x16xf32>
    %c0_10 = arith.constant 0 : index
    %c2 = arith.constant 2 : index
    %c0_11 = arith.constant 0 : index
    %6 = vector.load %arg3[%c0_10, %c2, %c0_11] : memref<8x16x16xf32, #tpu.memory_space<vmem>>, vector<8x14x16xf32>
    %7 = arith.addf %5, %6 : vector<8x14x16xf32>
    %8 = vector.extract_strided_slice %7 {offsets = [0, 0, 0], sizes = [8, 14, 14], strides = [1, 1, 1]} : vector<8x14x16xf32> to vector<8x14x14xf32>
    %9 = vector.extract_strided_slice %7 {offsets = [0, 0, 1], sizes = [8, 14, 14], strides = [1, 1, 1]} : vector<8x14x16xf32> to vector<8x14x14xf32>
    %10 = arith.addf %8, %9 : vector<8x14x14xf32>
    %11 = vector.extract_strided_slice %7 {offsets = [0, 0, 2], sizes = [8, 14, 14], strides = [1, 1, 1]} : vector<8x14x16xf32> to vector<8x14x14xf32>
    %12 = arith.addf %10, %11 : vector<8x14x14xf32>
    %13 = math.sqrt %12 : vector<8x14x14xf32>
    %c0_12 = arith.constant 0 : index
    %c0_13 = arith.constant 0 : index
    %c0_14 = arith.constant 0 : index
    %14 = vector.load %arg2[%c0_12, %c0_13, %c0_14] : memref<8x14x14xf32, #tpu.memory_space<vmem>>, vector<8x14x14xf32>
    tpu.vector_store %arg2[%c0_12, %c0_13, %c0_14], %13 {strides = array<i32>} : memref<8x14x14xf32, #tpu.memory_space<vmem>>, vector<8x14x14xf32>,
    return
  }
  func.func @transform_0(%arg0: i32) -> (i32, i32, i32) {
    %c0_i32 = arith.constant 0 : i32
    %c0_i32_0 = arith.constant 0 : i32
    %c0_i32_1 = arith.constant 0 : i32
    return %arg0, %c0_i32, %c0_i32_0 : i32, i32, i32
  }
  func.func @transform_1(%arg0: i32) -> (i32, i32, i32) {
    %c0_i32 = arith.constant 0 : i32
    %c0_i32_0 = arith.constant 0 : i32
    %c0_i32_1 = arith.constant 0 : i32
    return %arg0, %c0_i32, %c0_i32_0 : i32, i32, i32
  }
}

</mosaic_0001>

<llo_original>
// kernel: tpu_custom_call.1
$region0: #{tpu_custom_call.1}
  #allocation0 [shape = 'u32[]', space=smem, size = 0x4, offset = 0x4, fixed_abs, tag = 'smem constant byte address 0x4 - core index']
  #allocation1 [shape = 'u32[144,128]{1,0:T(1,128)}', space=vmem, size = 0x12000, scoped, tag = 'internal scratch']
  #allocation2 [shape = 'f32[8,16,16]{2,1,0:T(8,128)}', space=vmem, size = 0x10000, scoped, tag = 'scratch operand']
  %s0 = inlined_call_operand.hbm [shape: f32[8,16,16], index: 0, kind: input, shape index: {}]
  %s1 = inlined_call_operand.vmem [shape: f32[8,14,14], index: 1, kind: output, shape index: {}]
  %s2 = sld [smem:[#allocation0]]
  $region18: #{tpu_custom_call.1} parent=0
    _
  %s4 = ssub.s32 1, %s2
  %s5 = scalar_select 0, %s4, %s2
  $region1: #{tpu_custom_call.1} parent=0
    #allocation3 [shape = 'u8[65536]{0}', space=vmem, size = 0x10000, scoped, tag = 'input window, operand 0, single buffered']
    #allocation4 [shape = 's32[1]{0}', space=sflag, size = 0x4, scoped, tag = 'scoped memory for tpu_custom_call.1']
    %6 = vsyncpa [#allocation4], 0
    // Predicated region
    $region2: #{tpu_custom_call.1} parent=1 // pred_check
      _
    $region3: #{tpu_custom_call.1} parent=1 // pred_check_branch
      %8 = sbr.rel (0) target = $region5
    $region4: #{tpu_custom_call.1} parent=1 // pred_region
      %s10 = ssub.s32 2048, 2048
      %11 = vsyncadd [#allocation4], %s10
      %s12 = sshll.u32 [#allocation3], 4
      %s13 = int_to_ptr.vmem [resolvable:$true] %s12
      %18 = dma.hbm_to_vmem [thread:$0]  %s0, 2048, %s13, [#allocation4], 128, 128, 8
    $region5: #{tpu_custom_call.1} parent=1 // pred_fallthru
      _
    // Predicated region
    $region6: #{tpu_custom_call.1} parent=1 // pred_check
      _
    $region7: #{tpu_custom_call.1} parent=1 // pred_check_branch
      %20 = sbr.rel (0) target = $region9
    $region8: #{tpu_custom_call.1} parent=1 // pred_region
      %21 = dma.done [#allocation4], 2048
    $region9: #{tpu_custom_call.1} parent=1 // pred_fallthru
      _
    %v22 = vld [vmem:[#allocation3] sm:$0xff]
    %v23 = vld [vmem:[#allocation3 + $0x8] sm:$0xff]
    %v24 = vld [vmem:[#allocation3 + $0x10] sm:$0xff]
    %v25 = vld [vmem:[#allocation3 + $0x18] sm:$0xff]
    %v26 = vld [vmem:[#allocation3 + $0x20] sm:$0xff]
    %v27 = vld [vmem:[#allocation3 + $0x28] sm:$0xff]
    %v28 = vld [vmem:[#allocation3 + $0x30] sm:$0xff]
    %v29 = vld [vmem:[#allocation3 + $0x38] sm:$0xff]
    %v30 = vld [vmem:[#allocation3 + $0x40] sm:$0xff]
    %v31 = vld [vmem:[#allocation3 + $0x48] sm:$0xff]
    %v32 = vld [vmem:[#allocation3 + $0x50] sm:$0xff]
    %v33 = vld [vmem:[#allocation3 + $0x58] sm:$0xff]
    %v34 = vld [vmem:[#allocation3 + $0x60] sm:$0xff]
    %v35 = vld [vmem:[#allocation3 + $0x68] sm:$0xff]
    %v36 = vld [vmem:[#allocation3 + $0x70] sm:$0xff]
    %v37 = vld [vmem:[#allocation3 + $0x78] sm:$0xff]
    %v38 = vmul.f32 %v22, %v22
    %v39 = vmul.f32 %v23, %v23
    %v40 = vmul.f32 %v24, %v24
    %v41 = vmul.f32 %v25, %v25
    %v42 = vmul.f32 %v26, %v26
    %v43 = vmul.f32 %v27, %v27
    %v44 = vmul.f32 %v28, %v28
    %v45 = vmul.f32 %v29, %v29
    %v46 = vmul.f32 %v30, %v30
    %v47 = vmul.f32 %v31, %v31
    %v48 = vmul.f32 %v32, %v32
    %v49 = vmul.f32 %v33, %v33
    %v50 = vmul.f32 %v34, %v34
    %v51 = vmul.f32 %v35, %v35
    %v52 = vmul.f32 %v36, %v36
    %v53 = vmul.f32 %v37, %v37
    %vm54 = vcmask 130048
    %55 = vst.msk [vmem:[#allocation2] sm:$0xff] %vm54, %v38
    %56 = vst.msk [vmem:[#allocation2 + $0x8] sm:$0xff] %vm54, %v39
    %57 = vst.msk [vmem:[#allocation2 + $0x10] sm:$0xff] %vm54, %v40
    %58 = vst.msk [vmem:[#allocation2 + $0x18] sm:$0xff] %vm54, %v41
    %59 = vst.msk [vmem:[#allocation2 + $0x20] sm:$0xff] %vm54, %v42
    %60 = vst.msk [vmem:[#allocation2 + $0x28] sm:$0xff] %vm54, %v43
    %61 = vst.msk [vmem:[#allocation2 + $0x30] sm:$0xff] %vm54, %v44
    %62 = vst.msk [vmem:[#allocation2 + $0x38] sm:$0xff] %vm54, %v45
    %63 = vst.msk [vmem:[#allocation2 + $0x40] sm:$0xff] %vm54, %v46
    %64 = vst.msk [vmem:[#allocation2 + $0x48] sm:$0xff] %vm54, %v47
    %65 = vst.msk [vmem:[#allocation2 + $0x50] sm:$0xff] %vm54, %v48
    %66 = vst.msk [vmem:[#allocation2 + $0x58] sm:$0xff] %vm54, %v49
    %67 = vst.msk [vmem:[#allocation2 + $0x60] sm:$0xff] %vm54, %v50
    %68 = vst.msk [vmem:[#allocation2 + $0x68] sm:$0xff] %vm54, %v51
    %69 = vst.msk [vmem:[#allocation2 + $0x70] sm:$0xff] %vm54, %v52
    %70 = vst.msk [vmem:[#allocation2 + $0x78] sm:$0xff] %vm54, %v53
    %v71 = vld [vmem:[#allocation2] sm:$0xff]
    %v72 = vld [vmem:[#allocation2 + $0x8] sm:$0x3f]
    %v73 = vld [vmem:[#allocation2 + $0x10] sm:$0xff]
    %v74 = vld [vmem:[#allocation2 + $0x18] sm:$0x3f]
    %v75 = vld [vmem:[#allocation2 + $0x20] sm:$0xff]
    %v76 = vld [vmem:[#allocation2 + $0x28] sm:$0x3f]
    %v77 = vld [vmem:[#allocation2 + $0x30] sm:$0xff]
    %v78 = vld [vmem:[#allocation2 + $0x38] sm:$0x3f]
    %v79 = vld [vmem:[#allocation2 + $0x40] sm:$0xff]
    %v80 = vld [vmem:[#allocation2 + $0x48] sm:$0x3f]
    %v81 = vld [vmem:[#allocation2 + $0x50] sm:$0xff]
    %v82 = vld [vmem:[#allocation2 + $0x58] sm:$0x3f]
    %v83 = vld [vmem:[#allocation2 + $0x60] sm:$0xff]
    %v84 = vld [vmem:[#allocation2 + $0x68] sm:$0x3f]
    %v85 = vld [vmem:[#allocation2 + $0x70] sm:$0xff]
    %v86 = vld [vmem:[#allocation2 + $0x78] sm:$0x3f]
    %v87 = vld [vmem:[#allocation2 + $0x1] sm:$0xff]
    %v88 = vld [vmem:[#allocation2 + $0x9] sm:$0x3f]
    %v89 = vld [vmem:[#allocation2 + $0x11] sm:$0xff]
    %v90 = vld [vmem:[#allocation2 + $0x19] sm:$0x3f]
    %v91 = vld [vmem:[#allocation2 + $0x21] sm:$0xff]
    %v92 = vld [vmem:[#allocation2 + $0x29] sm:$0x3f]
    %v93 = vld [vmem:[#allocation2 + $0x31] sm:$0xff]
    %v94 = vld [vmem:[#allocation2 + $0x39] sm:$0x3f]
    %v95 = vld [vmem:[#allocation2 + $0x41] sm:$0xff]
    %v96 = vld [vmem:[#allocation2 + $0x49] sm:$0x3f]
    %v97 = vld [vmem:[#allocation2 + $0x51] sm:$0xff]
    %v98 = vld [vmem:[#allocation2 + $0x59] sm:$0x3f]
    %v99 = vld [vmem:[#allocation2 + $0x61] sm:$0xff]
    %v100 = vld [vmem:[#allocation2 + $0x69] sm:$0x3f]
    %v101 = vld [vmem:[#allocation2 + $0x71] sm:$0xff]
    %v102 = vld [vmem:[#allocation2 + $0x79] sm:$0x3f]
    %v103 = vadd.f32 %v71, %v87
    %v104 = vadd.f32 %v72, %v88
    %v105 = vadd.f32 %v73, %v89
    %v106 = vadd.f32 %v74, %v90
    %v107 = vadd.f32 %v75, %v91
    %v108 = vadd.f32 %v76, %v92
    %v109 = vadd.f32 %v77, %v93
    %v110 = vadd.f32 %v78, %v94
    %v111 = vadd.f32 %v79, %v95
    %v112 = vadd.f32 %v80, %v96
    %v113 = vadd.f32 %v81, %v97
    %v114 = vadd.f32 %v82, %v98
    %v115 = vadd.f32 %v83, %v99
    %v116 = vadd.f32 %v84, %v100
    %v117 = vadd.f32 %v85, %v101
    %v118 = vadd.f32 %v86, %v102
    %v119 = vld [vmem:[#allocation2 + $0x2] sm:$0xff]
    %v120 = vld [vmem:[#allocation2 + $0xa] sm:$0x3f]
    %v121 = vld [vmem:[#allocation2 + $0x12] sm:$0xff]
    %v122 = vld [vmem:[#allocation2 + $0x1a] sm:$0x3f]
    %v123 = vld [vmem:[#allocation2 + $0x22] sm:$0xff]
    %v124 = vld [vmem:[#allocation2 + $0x2a] sm:$0x3f]
    %v125 = vld [vmem:[#allocation2 + $0x32] sm:$0xff]
    %v126 = vld [vmem:[#allocation2 + $0x3a] sm:$0x3f]
    %v127 = vld [vmem:[#allocation2 + $0x42] sm:$0xff]
    %v128 = vld [vmem:[#allocation2 + $0x4a] sm:$0x3f]
    %v129 = vld [vmem:[#allocation2 + $0x52] sm:$0xff]
    %v130 = vld [vmem:[#allocation2 + $0x5a] sm:$0x3f]
    %v131 = vld [vmem:[#allocation2 + $0x62] sm:$0xff]
    %v132 = vld [vmem:[#allocation2 + $0x6a] sm:$0x3f]
    %v133 = vld [vmem:[#allocation2 + $0x72] sm:$0xff]
    %v134 = vld [vmem:[#allocation2 + $0x7a] sm:$0x3f]
    %v135 = vadd.f32 %v103, %v119
    %v136 = vadd.f32 %v104, %v120
    %v137 = vadd.f32 %v105, %v121
    %v138 = vadd.f32 %v106, %v122
    %v139 = vadd.f32 %v107, %v123
    %v140 = vadd.f32 %v108, %v124
    %v141 = vadd.f32 %v109, %v125
    %v142 = vadd.f32 %v110, %v126
    %v143 = vadd.f32 %v111, %v127
    %v144 = vadd.f32 %v112, %v128
    %v145 = vadd.f32 %v113, %v129
    %v146 = vadd.f32 %v114, %v130
    %v147 = vadd.f32 %v115, %v131
    %v148 = vadd.f32 %v116, %v132
    %v149 = vadd.f32 %v117, %v133
    %v150 = vadd.f32 %v118, %v134
    %167 = vrot.lane.b32.xlu0 %v135, 127
    %v168 = vpop.permute.xlu0 %167
    %169 = vrot.lane.b32.xlu0 %v136, 127
    %v170 = vpop.permute.xlu0 %169
    %171 = vrot.lane.b32.xlu0 %v137, 127
    %v172 = vpop.permute.xlu0 %171
    %173 = vrot.lane.b32.xlu0 %v138, 127
    %v174 = vpop.permute.xlu0 %173
    %175 = vrot.lane.b32.xlu0 %v139, 127
    %v176 = vpop.permute.xlu0 %175
    %177 = vrot.lane.b32.xlu0 %v140, 127
    %v178 = vpop.permute.xlu0 %177
    %179 = vrot.lane.b32.xlu0 %v141, 127
    %v180 = vpop.permute.xlu0 %179
    %181 = vrot.lane.b32.xlu0 %v142, 127
    %v182 = vpop.permute.xlu0 %181
    %183 = vrot.lane.b32.xlu0 %v143, 127
    %v184 = vpop.permute.xlu0 %183
    %185 = vrot.lane.b32.xlu0 %v144, 127
    %v186 = vpop.permute.xlu0 %185
    %187 = vrot.lane.b32.xlu0 %v145, 127
    %v188 = vpop.permute.xlu0 %187
    %189 = vrot.lane.b32.xlu0 %v146, 127
    %v190 = vpop.permute.xlu0 %189
    %191 = vrot.lane.b32.xlu0 %v147, 127
    %v192 = vpop.permute.xlu0 %191
    %193 = vrot.lane.b32.xlu0 %v148, 127
    %v194 = vpop.permute.xlu0 %193
    %195 = vrot.lane.b32.xlu0 %v149, 127
    %v196 = vpop.permute.xlu0 %195
    %197 = vrot.lane.b32.xlu0 %v150, 127
    %v198 = vpop.permute.xlu0 %197
    %v215 = vadd.f32 %v135, %v168
    %v216 = vadd.f32 %v136, %v170
    %v217 = vadd.f32 %v137, %v172
    %v218 = vadd.f32 %v138, %v174
    %v219 = vadd.f32 %v139, %v176
    %v220 = vadd.f32 %v140, %v178
    %v221 = vadd.f32 %v141, %v180
    %v222 = vadd.f32 %v142, %v182
    %v223 = vadd.f32 %v143, %v184
    %v224 = vadd.f32 %v144, %v186
    %v225 = vadd.f32 %v145, %v188
    %v226 = vadd.f32 %v146, %v190
    %v227 = vadd.f32 %v147, %v192
    %v228 = vadd.f32 %v148, %v194
    %v229 = vadd.f32 %v149, %v196
    %v230 = vadd.f32 %v150, %v198
    %231 = vrot.lane.b32.xlu0 %v135, 126
    %v232 = vpop.permute.xlu0 %231
    %233 = vrot.lane.b32.xlu0 %v136, 126
    %v234 = vpop.permute.xlu0 %233
    %235 = vrot.lane.b32.xlu0 %v137, 126
    %v236 = vpop.permute.xlu0 %235
    %237 = vrot.lane.b32.xlu0 %v138, 126
    %v238 = vpop.permute.xlu0 %237
    %239 = vrot.lane.b32.xlu0 %v139, 126
    %v240 = vpop.permute.xlu0 %239
    %241 = vrot.lane.b32.xlu0 %v140, 126
    %v242 = vpop.permute.xlu0 %241
    %243 = vrot.lane.b32.xlu0 %v141, 126
    %v244 = vpop.permute.xlu0 %243
    %245 = vrot.lane.b32.xlu0 %v142, 126
    %v246 = vpop.permute.xlu0 %245
    %247 = vrot.lane.b32.xlu0 %v143, 126
    %v248 = vpop.permute.xlu0 %247
    %249 = vrot.lane.b32.xlu0 %v144, 126
    %v250 = vpop.permute.xlu0 %249
    %251 = vrot.lane.b32.xlu0 %v145, 126
    %v252 = vpop.permute.xlu0 %251
    %253 = vrot.lane.b32.xlu0 %v146, 126
    %v254 = vpop.permute.xlu0 %253
    %255 = vrot.lane.b32.xlu0 %v147, 126
    %v256 = vpop.permute.xlu0 %255
    %257 = vrot.lane.b32.xlu0 %v148, 126
    %v258 = vpop.permute.xlu0 %257
    %259 = vrot.lane.b32.xlu0 %v149, 126
    %v260 = vpop.permute.xlu0 %259
    %261 = vrot.lane.b32.xlu0 %v150, 126
    %v262 = vpop.permute.xlu0 %261
    %v279 = vadd.f32 %v215, %v232
    %v280 = vadd.f32 %v216, %v234
    %v281 = vadd.f32 %v217, %v236
    %v282 = vadd.f32 %v218, %v238
    %v283 = vadd.f32 %v219, %v240
    %v284 = vadd.f32 %v220, %v242
    %v285 = vadd.f32 %v221, %v244
    %v286 = vadd.f32 %v222, %v246
    %v287 = vadd.f32 %v223, %v248
    %v288 = vadd.f32 %v224, %v250
    %v289 = vadd.f32 %v225, %v252
    %v290 = vadd.f32 %v226, %v254
    %v291 = vadd.f32 %v227, %v256
    %v292 = vadd.f32 %v228, %v258
    %v293 = vadd.f32 %v229, %v260
    %v294 = vadd.f32 %v230, %v262
    %v295 = vrsqrt.pop %v279
    %v296 = vmul.f32 %v279, %v295
    %vm297 = vcmp.eq.f32.partialorder %v279, inf
    %v298 = vsel %vm297, %v279, %v296
    %vm299 = vcmp.eq.f32.partialorder %v279, 0.0
    %v300 = vand.u32 %v279, 2147483648
    %v301 = vsel %vm299, %v300, %v298
    %v302 = vrsqrt.pop %v280
    %v303 = vmul.f32 %v280, %v302
    %vm304 = vcmp.eq.f32.partialorder %v280, inf
    %v305 = vsel %vm304, %v280, %v303
    %vm306 = vcmp.eq.f32.partialorder %v280, 0.0
    %v307 = vand.u32 %v280, 2147483648
    %v308 = vsel %vm306, %v307, %v305
    %v309 = vrsqrt.pop %v281
    %v310 = vmul.f32 %v281, %v309
    %vm311 = vcmp.eq.f32.partialorder %v281, inf
    %v312 = vsel %vm311, %v281, %v310
    %vm313 = vcmp.eq.f32.partialorder %v281, 0.0
    %v314 = vand.u32 %v281, 2147483648
    %v315 = vsel %vm313, %v314, %v312
    %v316 = vrsqrt.pop %v282
    %v317 = vmul.f32 %v282, %v316
    %vm318 = vcmp.eq.f32.partialorder %v282, inf
    %v319 = vsel %vm318, %v282, %v317
    %vm320 = vcmp.eq.f32.partialorder %v282, 0.0
    %v321 = vand.u32 %v282, 2147483648
    %v322 = vsel %vm320, %v321, %v319
    %v323 = vrsqrt.pop %v283
    %v324 = vmul.f32 %v283, %v323
    %vm325 = vcmp.eq.f32.partialorder %v283, inf
    %v326 = vsel %vm325, %v283, %v324
    %vm327 = vcmp.eq.f32.partialorder %v283, 0.0
    %v328 = vand.u32 %v283, 2147483648
    %v329 = vsel %vm327, %v328, %v326
    %v330 = vrsqrt.pop %v284
    %v331 = vmul.f32 %v284, %v330
    %vm332 = vcmp.eq.f32.partialorder %v284, inf
    %v333 = vsel %vm332, %v284, %v331
    %vm334 = vcmp.eq.f32.partialorder %v284, 0.0
    %v335 = vand.u32 %v284, 2147483648
    %v336 = vsel %vm334, %v335, %v333
    %v337 = vrsqrt.pop %v285
    %v338 = vmul.f32 %v285, %v337
    %vm339 = vcmp.eq.f32.partialorder %v285, inf
    %v340 = vsel %vm339, %v285, %v338
    %vm341 = vcmp.eq.f32.partialorder %v285, 0.0
    %v342 = vand.u32 %v285, 2147483648
    %v343 = vsel %vm341, %v342, %v340
    %v344 = vrsqrt.pop %v286
    %v345 = vmul.f32 %v286, %v344
    %vm346 = vcmp.eq.f32.partialorder %v286, inf
    %v347 = vsel %vm346, %v286, %v345
    %vm348 = vcmp.eq.f32.partialorder %v286, 0.0
    %v349 = vand.u32 %v286, 2147483648
    %v350 = vsel %vm348, %v349, %v347
    %v351 = vrsqrt.pop %v287
    %v352 = vmul.f32 %v287, %v351
    %vm353 = vcmp.eq.f32.partialorder %v287, inf
    %v354 = vsel %vm353, %v287, %v352
    %vm355 = vcmp.eq.f32.partialorder %v287, 0.0
    %v356 = vand.u32 %v287, 2147483648
    %v357 = vsel %vm355, %v356, %v354
    %v358 = vrsqrt.pop %v288
    %v359 = vmul.f32 %v288, %v358
    %vm360 = vcmp.eq.f32.partialorder %v288, inf
    %v361 = vsel %vm360, %v288, %v359
    %vm362 = vcmp.eq.f32.partialorder %v288, 0.0
    %v363 = vand.u32 %v288, 2147483648
    %v364 = vsel %vm362, %v363, %v361
    %v365 = vrsqrt.pop %v289
    %v366 = vmul.f32 %v289, %v365
    %vm367 = vcmp.eq.f32.partialorder %v289, inf
    %v368 = vsel %vm367, %v289, %v366
    %vm369 = vcmp.eq.f32.partialorder %v289, 0.0
    %v370 = vand.u32 %v289, 2147483648
    %v371 = vsel %vm369, %v370, %v368
    %v372 = vrsqrt.pop %v290
    %v373 = vmul.f32 %v290, %v372
    %vm374 = vcmp.eq.f32.partialorder %v290, inf
    %v375 = vsel %vm374, %v290, %v373
    %vm376 = vcmp.eq.f32.partialorder %v290, 0.0
    %v377 = vand.u32 %v290, 2147483648
    %v378 = vsel %vm376, %v377, %v375
    %v379 = vrsqrt.pop %v291
    %v380 = vmul.f32 %v291, %v379
    %vm381 = vcmp.eq.f32.partialorder %v291, inf
    %v382 = vsel %vm381, %v291, %v380
    %vm383 = vcmp.eq.f32.partialorder %v291, 0.0
    %v384 = vand.u32 %v291, 2147483648
    %v385 = vsel %vm383, %v384, %v382
    %v386 = vrsqrt.pop %v292
    %v387 = vmul.f32 %v292, %v386
    %vm388 = vcmp.eq.f32.partialorder %v292, inf
    %v389 = vsel %vm388, %v292, %v387
    %vm390 = vcmp.eq.f32.partialorder %v292, 0.0
    %v391 = vand.u32 %v292, 2147483648
    %v392 = vsel %vm390, %v391, %v389
    %v393 = vrsqrt.pop %v293
    %v394 = vmul.f32 %v293, %v393
    %vm395 = vcmp.eq.f32.partialorder %v293, inf
    %v396 = vsel %vm395, %v293, %v394
    %vm397 = vcmp.eq.f32.partialorder %v293, 0.0
    %v398 = vand.u32 %v293, 2147483648
    %v399 = vsel %vm397, %v398, %v396
    %v400 = vrsqrt.pop %v294
    %v401 = vmul.f32 %v294, %v400
    %vm402 = vcmp.eq.f32.partialorder %v294, inf
    %v403 = vsel %vm402, %v294, %v401
    %vm404 = vcmp.eq.f32.partialorder %v294, 0.0
    %v405 = vand.u32 %v294, 2147483648
    %v406 = vsel %vm404, %v405, %v403
    %vm407 = vcmask 113664
    %408 = vst.msk [vmem:[%s1] sm:$0xff] %vm407, %v301
    %vm409 = vcmask 111616
    %410 = vst.msk [vmem:[%s1 + $0x8] sm:$0x3f] %vm409, %v308
    %411 = vst.msk [vmem:[%s1 + $0x10] sm:$0xff] %vm407, %v315
    %412 = vst.msk [vmem:[%s1 + $0x18] sm:$0x3f] %vm409, %v322
    %413 = vst.msk [vmem:[%s1 + $0x20] sm:$0xff] %vm407, %v329
    %414 = vst.msk [vmem:[%s1 + $0x28] sm:$0x3f] %vm409, %v336
    %415 = vst.msk [vmem:[%s1 + $0x30] sm:$0xff] %vm407, %v343
    %416 = vst.msk [vmem:[%s1 + $0x38] sm:$0x3f] %vm409, %v350
    %417 = vst.msk [vmem:[%s1 + $0x40] sm:$0xff] %vm407, %v357
    %418 = vst.msk [vmem:[%s1 + $0x48] sm:$0x3f] %vm409, %v364
    %419 = vst.msk [vmem:[%s1 + $0x50] sm:$0xff] %vm407, %v371
    %420 = vst.msk [vmem:[%s1 + $0x58] sm:$0x3f] %vm409, %v378
    %421 = vst.msk [vmem:[%s1 + $0x60] sm:$0xff] %vm407, %v385
    %422 = vst.msk [vmem:[%s1 + $0x68] sm:$0x3f] %vm409, %v392
    %423 = vst.msk [vmem:[%s1 + $0x70] sm:$0xff] %vm407, %v399
    %424 = vst.msk [vmem:[%s1 + $0x78] sm:$0x3f] %vm409, %v406
    // Predicated region
    $region10: #{tpu_custom_call.1} parent=1 // pred_check
      _
    $region11: #{tpu_custom_call.1} parent=1 // pred_check_branch
      %426 = sbr.rel (0) target = $region13
    $region12: #{tpu_custom_call.1} parent=1 // pred_region
      _
    $region13: #{tpu_custom_call.1} parent=1 // pred_fallthru
      _
    // Predicated region
    $region14: #{tpu_custom_call.1} parent=1 // pred_check
      _
    $region15: #{tpu_custom_call.1} parent=1 // pred_check_branch
      %428 = sbr.rel (0) target = $region17
    $region16: #{tpu_custom_call.1} parent=1 // pred_region
      _
    $region17: #{tpu_custom_call.1} parent=1 // pred_fallthru
      _
    %429 = vsyncpa [#allocation4], 1

</llo_original>
